<compile_context>
chip_gen: v7x
topology: tpu7x:2x2x1
jax: 0.10.0
libtpu: 0.0.40
codegen_flags: <defaults>
</compile_context>

<pallas_src>
import math

import jax
import jax.numpy as jnp
from jax.experimental import pallas as pl
from jax.experimental.pallas import tpu as pltpu


# ------------------------------ tiling helpers -------------------------------

def _pick_tile(dim, target, align):
    """Largest multiple of `align` <= target dividing dim; else smallest aligned
    divisor above target; else the full dim."""
    if dim <= target:
        return dim
    t = (target // align) * align
    while t >= align:
        if dim % t == 0:
            return t
        t -= align
    # nothing below target: search upward for the smallest aligned divisor
    t = ((target // align) + 1) * align
    while t < dim:
        if dim % t == 0:
            return t
        t += align
    # TODO(synk): no aligned divisor exists -> fall back to the full dimension;
    # real-shape users should pad M / V to multiples of 16 / 128.
    return dim


def _head_group(num_heads, head_dim):
    """Smallest head group whose lane width is a multiple of 128, else all heads."""
    for g in range(1, num_heads + 1):
        if num_heads % g == 0 and (g * head_dim) % 128 == 0:
            return g
    return num_heads


def _bytes(shape, dtype):
    n = 1
    for s in shape:
        n *= int(s)
    return n * jnp.dtype(dtype).itemsize


def _compiler_params(semantics, block_bytes, scratch_bytes=0):
    """Explicit VMEM budget: double-buffered blocks + scratch + headroom,
    floored at the 32 MiB scoped default and capped well inside every
    generation's physical VMEM (v7x has only 64 MiB)."""
    need = 2 * int(block_bytes) + int(scratch_bytes) + (4 << 20)
    limit = int(min(max(need, 32 << 20), 100 << 20))
    return pltpu.CompilerParams(dimension_semantics=semantics,
                                vmem_limit_bytes=limit)


# ----------------------------- tiled linear kernels ---------------------------

def _matmul_bias_act_kernel(activation):
    def kernel(x_ref, w_ref, b_ref, o_ref, acc_ref):
        k = pl.program_id(2)

        @pl.when(k == 0)
        def _init():
            acc_ref[...] = jnp.zeros_like(acc_ref)

        acc_ref[...] += jnp.dot(x_ref[...], w_ref[...],
                                preferred_element_type=jnp.float32)

        @pl.when(k == pl.num_programs(2) - 1)
        def _fin():
            y = acc_ref[...] + b_ref[...]
            if activation == "gelu":
                # TODO(synk): HF BERT uses exact erf GELU; tanh approximation used
                # here for Mosaic portability.
                y = 0.5 * y * (1.0 + jnp.tanh(0.7978845608028654 *
                                              (y + 0.044715 * y * y * y)))
            o_ref[...] = y.astype(o_ref.dtype)
    return kernel


def linear(x, w, b, activation=None, out_dtype=jnp.bfloat16,
           tm=512, tn=1024, tk=1536):
    """x: [M, K] bf16, w: [K, N] bf16, b: [N] f32 -> [M, N] out_dtype."""
    M, K = x.shape
    N = w.shape[1]
    tm = _pick_tile(M, tm, 16)
    tn = _pick_tile(N, tn, 128)
    tk = _pick_tile(K, tk, 128)
    block_bytes = (_bytes((tm, tk), x.dtype) + _bytes((tk, tn), w.dtype)
                   + _bytes((1, tn), jnp.float32) + _bytes((tm, tn), out_dtype))
    return pl.pallas_call(
        _matmul_bias_act_kernel(activation),
        out_shape=jax.ShapeDtypeStruct((M, N), out_dtype),
        grid=(M // tm, N // tn, K // tk),
        in_specs=[
            pl.BlockSpec((tm, tk), lambda i, j, k: (i, k)),
            pl.BlockSpec((tk, tn), lambda i, j, k: (k, j)),
            pl.BlockSpec((1, tn), lambda i, j, k: (0, j)),
        ],
        out_specs=pl.BlockSpec((tm, tn), lambda i, j, k: (i, j)),
        scratch_shapes=[pltpu.VMEM((tm, tn), jnp.float32)],
        compiler_params=_compiler_params(
            ("parallel", "parallel", "arbitrary"), block_bytes,
            scratch_bytes=_bytes((tm, tn), jnp.float32)),
    )(x, w, b.reshape(1, N).astype(jnp.float32))


def _qkv_kernel(x_ref, w_ref, b_ref, o_ref, acc_ref):
    k = pl.program_id(2)

    @pl.when(k == 0)
    def _init():
        acc_ref[...] = jnp.zeros_like(acc_ref)

    acc_ref[...] += jnp.dot(x_ref[...], w_ref[0],
                            preferred_element_type=jnp.float32)

    @pl.when(k == pl.num_programs(2) - 1)
    def _fin():
        o_ref[0] = (acc_ref[...] + b_ref[0]).astype(o_ref.dtype)


def qkv_linear(x, w_qkv, b_qkv, tm=512, tn=1024, tk=1536):
    """Fused Q/K/V projection. x: [M, H] bf16, w_qkv: [3, H, H] bf16,
    b_qkv: [3, H] f32 -> [3, M, H] bf16 (planes = q, k, v)."""
    M, K = x.shape
    H = w_qkv.shape[2]
    tm = _pick_tile(M, tm, 16)
    tn = _pick_tile(H, tn, 128)
    tk = _pick_tile(K, tk, 128)
    n_h = H // tn
    block_bytes = (_bytes((tm, tk), x.dtype) + _bytes((1, tk, tn), w_qkv.dtype)
                   + _bytes((1, 1, tn), jnp.float32)
                   + _bytes((1, tm, tn), jnp.bfloat16))
    return pl.pallas_call(
        _qkv_kernel,
        out_shape=jax.ShapeDtypeStruct((3, M, H), jnp.bfloat16),
        grid=(M // tm, 3 * n_h, K // tk),
        in_specs=[
            pl.BlockSpec((tm, tk), lambda i, j, k: (i, k)),
            pl.BlockSpec((1, tk, tn), lambda i, j, k: (j // n_h, k, j % n_h)),
            pl.BlockSpec((1, 1, tn), lambda i, j, k: (j // n_h, 0, j % n_h)),
        ],
        out_specs=pl.BlockSpec((1, tm, tn), lambda i, j, k: (j // n_h, i, j % n_h)),
        scratch_shapes=[pltpu.VMEM((tm, tn), jnp.float32)],
        compiler_params=_compiler_params(
            ("parallel", "parallel", "arbitrary"), block_bytes,
            scratch_bytes=_bytes((tm, tn), jnp.float32)),
    )(x, w_qkv, b_qkv.reshape(3, 1, H).astype(jnp.float32))


def _matmul_res_ln_kernel(eps):
    def kernel(x_ref, w_ref, b_ref, r_ref, g_ref, be_ref, o_ref, acc_ref):
        k = pl.program_id(1)

        @pl.when(k == 0)
        def _init():
            acc_ref[...] = jnp.zeros_like(acc_ref)

        acc_ref[...] += jnp.dot(x_ref[...], w_ref[...],
                                preferred_element_type=jnp.float32)

        @pl.when(k == pl.num_programs(1) - 1)
        def _fin():
            y = acc_ref[...] + b_ref[...] + r_ref[...].astype(jnp.float32)
            mu = jnp.mean(y, axis=-1, keepdims=True)
            yc = y - mu
            var = jnp.mean(yc * yc, axis=-1, keepdims=True)
            o_ref[...] = (yc * jax.lax.rsqrt(var + eps) * g_ref[...]
                          + be_ref[...]).astype(o_ref.dtype)
    return kernel


def linear_residual_layernorm(x, w, b, residual, gamma, beta,
                              eps=1e-12, tm=512, tk=1536):
    """(x @ w + b + residual) -> LayerNorm, fused.  N (=H) kept whole for LN."""
    M, K = x.shape
    N = w.shape[1]
    tm = _pick_tile(M, tm, 16)
    tk = _pick_tile(K, tk, 128)
    block_bytes = (_bytes((tm, tk), x.dtype) + _bytes((tk, N), w.dtype)
                   + 3 * _bytes((1, N), jnp.float32)
                   + _bytes((tm, N), jnp.bfloat16) * 2)
    return pl.pallas_call(
        _matmul_res_ln_kernel(eps),
        out_shape=jax.ShapeDtypeStruct((M, N), jnp.bfloat16),
        grid=(M // tm, K // tk),
        in_specs=[
            pl.BlockSpec((tm, tk), lambda i, k: (i, k)),
            pl.BlockSpec((tk, N), lambda i, k: (k, 0)),
            pl.BlockSpec((1, N), lambda i, k: (0, 0)),
            pl.BlockSpec((tm, N), lambda i, k: (i, 0)),
            pl.BlockSpec((1, N), lambda i, k: (0, 0)),
            pl.BlockSpec((1, N), lambda i, k: (0, 0)),
        ],
        out_specs=pl.BlockSpec((tm, N), lambda i, k: (i, 0)),
        scratch_shapes=[pltpu.VMEM((tm, N), jnp.float32)],
        compiler_params=_compiler_params(
            ("parallel", "arbitrary"), block_bytes,
            scratch_bytes=_bytes((tm, N), jnp.float32)),
    )(x, w, b.reshape(1, N).astype(jnp.float32), residual,
      gamma.reshape(1, N), beta.reshape(1, N))


# ------------------------------- LayerNorm kernel -----------------------------

def _layernorm_kernel(eps):
    def kernel(x_ref, g_ref, b_ref, o_ref):
        x = x_ref[...].astype(jnp.float32)
        mu = jnp.mean(x, axis=-1, keepdims=True)
        xc = x - mu
        var = jnp.mean(xc * xc, axis=-1, keepdims=True)
        o_ref[...] = (xc * jax.lax.rsqrt(var + eps) * g_ref[...]
                      + b_ref[...]).astype(o_ref.dtype)
    return kernel


def layer_norm(x, gamma, beta, eps=1e-12, tm=1024, out_dtype=jnp.bfloat16):
    M, H = x.shape
    tm = _pick_tile(M, tm, 16)
    block_bytes = (_bytes((tm, H), x.dtype) + 2 * _bytes((1, H), jnp.float32)
                   + _bytes((tm, H), out_dtype))
    return pl.pallas_call(
        _layernorm_kernel(eps),
        out_shape=jax.ShapeDtypeStruct((M, H), out_dtype),
        grid=(M // tm,),
        in_specs=[
            pl.BlockSpec((tm, H), lambda i: (i, 0)),
            pl.BlockSpec((1, H), lambda i: (0, 0)),
            pl.BlockSpec((1, H), lambda i: (0, 0)),
        ],
        out_specs=pl.BlockSpec((tm, H), lambda i: (i, 0)),
        compiler_params=_compiler_params(("parallel",), block_bytes),
    )(x, gamma.reshape(1, H), beta.reshape(1, H))


# ------------------------------- attention kernel -----------------------------

def _attention_kernel(g, d, scale, use_mask):
    def kernel(*refs):
        if use_mask:
            q_ref, k_ref, v_ref, m_ref, o_ref, ctx_sc = refs
            bias = (1.0 - m_ref[0].astype(jnp.float32)) * -10000.0   # [tq, S] f32
        else:
            q_ref, k_ref, v_ref, o_ref, ctx_sc = refs
            bias = None
        for h in range(g):                                           # unrolled, small g
            lo = h * d
            qh = q_ref[0, 0, :, lo:lo + d]                           # [tq, d] bf16
            kh = k_ref[0, 0, :, lo:lo + d]                           # [S, d]  bf16
            vh = v_ref[0, 0, :, lo:lo + d]                           # [S, d]  bf16
            # TODO(synk): QK^T uses contract-on-dim-1 dot_general (may cost one XLU
            # transpose); a pre-transposed K layout would avoid it.
            s = jax.lax.dot_general(
                qh, kh, (((1,), (1,)), ((), ())),
                preferred_element_type=jnp.float32) * scale          # [tq, S] f32
            if bias is not None:
                s = s + bias
            s = s - jnp.max(s, axis=-1, keepdims=True)
            p = jnp.exp(s)
            p = p * (1.0 / jnp.sum(p, axis=-1, keepdims=True))       # exact softmax
            ctx_sc[:, lo:lo + d] = jnp.dot(p.astype(vh.dtype), vh,
                                           preferred_element_type=jnp.float32)
        # single lane-dense [tq, g*d] store
        o_ref[0] = ctx_sc[...].astype(o_ref.dtype)
    return kernel


def multi_head_attention(qkv, mask3d, num_heads, tq=256):
    """qkv: [3, B, S, H] bf16 (q/k/v planes); mask3d: [B, S, S] (1 = visible) or None."""
    _, B, S, H = qkv.shape
    d = H // num_heads
    g = _head_group(num_heads, d)                  # heads per block (lane-dense)
    gd = g * d
    n_hg = num_heads // g
    tq = _pick_tile(S, tq, 16)
    nq = S // tq
    scale = 1.0 / math.sqrt(d)
    use_mask = mask3d is not None

    in_specs = [
        pl.BlockSpec((1, 1, tq, gd), lambda b, h, q: (0, b, q, h)),
        pl.BlockSpec((1, 1, S, gd), lambda b, h, q: (1, b, 0, h)),
        pl.BlockSpec((1, 1, S, gd), lambda b, h, q: (2, b, 0, h)),
    ]
    args = [qkv, qkv, qkv]
    block_bytes = (_bytes((tq, gd), jnp.bfloat16) + 2 * _bytes((S, gd), jnp.bfloat16)
                   + _bytes((tq, gd), jnp.bfloat16))
    if use_mask:
        in_specs.append(pl.BlockSpec((1, tq, S), lambda b, h, q: (b, q, 0)))
        args.append(mask3d.astype(jnp.bfloat16))   # bf16 mask: half the HBM traffic
        block_bytes += _bytes((tq, S), jnp.bfloat16)

    return pl.pallas_call(
        _attention_kernel(g, d, scale, use_mask),
        out_shape=jax.ShapeDtypeStruct((B, S, H), jnp.bfloat16),
        grid=(B, n_hg, nq),
        in_specs=in_specs,
        out_specs=pl.BlockSpec((1, tq, gd), lambda b, h, q: (b, q, h)),
        scratch_shapes=[pltpu.VMEM((tq, gd), jnp.float32)],
        compiler_params=_compiler_params(
            ("parallel", "parallel", "arbitrary"), block_bytes,
            scratch_bytes=_bytes((tq, gd), jnp.float32)),
    )(*args)


# ----------------- streaming classifier: softmax & cross-entropy --------------

def _lse_kernel(x_ref, w_ref, b_ref, o_ref, m_sc, l_sc):
    j = pl.program_id(1)

    @pl.when(j == 0)
    def _init():
        m_sc[...] = jnp.full_like(m_sc, -1e30)
        l_sc[...] = jnp.zeros_like(l_sc)

    s = jnp.dot(x_ref[...], w_ref[...],
                preferred_element_type=jnp.float32) + b_ref[...]
    m_new = jnp.maximum(m_sc[...], jnp.max(s, axis=-1, keepdims=True))
    l_sc[...] = (l_sc[...] * jnp.exp(m_sc[...] - m_new)
                 + jnp.sum(jnp.exp(s - m_new), axis=-1, keepdims=True))
    m_sc[...] = m_new

    @pl.when(j == pl.num_programs(1) - 1)
    def _fin():
        o_ref[...] = m_sc[...] + jnp.log(l_sc[...])


def classifier_lse(x, w, b, tm=1024, tv=2048):
    M, H = x.shape
    V = w.shape[1]
    tm = _pick_tile(M, tm, 16)
    tv = _pick_tile(V, tv, 128)
    block_bytes = (_bytes((tm, H), x.dtype) + _bytes((H, tv), w.dtype)
                   + _bytes((1, tv), jnp.float32) + _bytes((tm, 1), jnp.float32))
    return pl.pallas_call(
        _lse_kernel,
        out_shape=jax.ShapeDtypeStruct((M, 1), jnp.float32),
        grid=(M // tm, V // tv),
        in_specs=[
            pl.BlockSpec((tm, H), lambda i, j: (i, 0)),
            pl.BlockSpec((H, tv), lambda i, j: (0, j)),
            pl.BlockSpec((1, tv), lambda i, j: (0, j)),
        ],
        out_specs=pl.BlockSpec((tm, 1), lambda i, j: (i, 0)),
        scratch_shapes=[pltpu.VMEM((tm, 1), jnp.float32),
                        pltpu.VMEM((tm, 1), jnp.float32)],
        compiler_params=_compiler_params(
            ("parallel", "arbitrary"), block_bytes,
            scratch_bytes=2 * _bytes((tm, 1), jnp.float32)),
    )(x, w, b.reshape(1, V).astype(jnp.float32))


def _probs_kernel(x_ref, w_ref, b_ref, lse_ref, o_ref):
    s = jnp.dot(x_ref[...], w_ref[...],
                preferred_element_type=jnp.float32) + b_ref[...]
    o_ref[...] = jnp.exp(s - lse_ref[...]).astype(o_ref.dtype)


def classifier_softmax(x, w, b, tm=1024, tv=2048):
    """softmax(x @ w + b) streamed over vocab tiles; probabilities stored bf16.
    TODO(synk): the x@w matmul is recomputed in the probs pass (LSE pass + probs
    pass); fusing would need the [tm, V] logits resident, which doesn't fit VMEM."""
    M, H = x.shape
    V = w.shape[1]
    lse = classifier_lse(x, w, b, tm=tm, tv=tv)
    tm = _pick_tile(M, tm, 16)
    tv = _pick_tile(V, tv, 128)
    block_bytes = (_bytes((tm, H), x.dtype) + _bytes((H, tv), w.dtype)
                   + _bytes((1, tv), jnp.float32) + _bytes((tm, 1), jnp.float32)
                   + _bytes((tm, tv), jnp.bfloat16))
    return pl.pallas_call(
        _probs_kernel,
        out_shape=jax.ShapeDtypeStruct((M, V), jnp.bfloat16),
        grid=(M // tm, V // tv),
        in_specs=[
            pl.BlockSpec((tm, H), lambda i, j: (i, 0)),
            pl.BlockSpec((H, tv), lambda i, j: (0, j)),
            pl.BlockSpec((1, tv), lambda i, j: (0, j)),
            pl.BlockSpec((tm, 1), lambda i, j: (i, 0)),
        ],
        out_specs=pl.BlockSpec((tm, tv), lambda i, j: (i, j)),
        compiler_params=_compiler_params(("parallel", "parallel"), block_bytes),
    )(x, w, b.reshape(1, V).astype(jnp.float32), lse)


def _cross_entropy_kernel(x_ref, w_ref, b_ref, y_ref, num_ref, den_ref,
                          m_sc, l_sc, lab_sc):
    j = pl.program_id(1)
    nj = pl.num_programs(1)
    tv = w_ref.shape[1]

    @pl.when(j == 0)
    def _row_init():
        m_sc[...] = jnp.full_like(m_sc, -1e30)
        l_sc[...] = jnp.zeros_like(l_sc)
        lab_sc[...] = jnp.zeros_like(lab_sc)

    s = jnp.dot(x_ref[...], w_ref[...],
                preferred_element_type=jnp.float32) + b_ref[...]
    labels = y_ref[...]                                          # [tm, 1] int32
    col = jax.lax.broadcasted_iota(jnp.int32, s.shape, 1) + j * tv
    lab_sc[...] += jnp.sum(jnp.where(col == labels, s, 0.0),
                           axis=-1, keepdims=True)
    m_new = jnp.maximum(m_sc[...], jnp.max(s, axis=-1, keepdims=True))
    l_sc[...] = (l_sc[...] * jnp.exp(m_sc[...] - m_new)
                 + jnp.sum(jnp.exp(s - m_new), axis=-1, keepdims=True))
    m_sc[...] = m_new

    @pl.when(j == nj - 1)
    def _row_fin():
        lse = m_sc[...] + jnp.log(l_sc[...])
        per_tok = lse - lab_sc[...]                              # [tm, 1]
        valid = (labels != -100).astype(jnp.float32)             # torch ignore_index
        num_ref[...] = jnp.sum(per_tok * valid, axis=0, keepdims=True)
        den_ref[...] = jnp.sum(valid, axis=0, keepdims=True)


def cross_entropy_from_hidden(x, w, b, labels, tm=1024, tv=2048):
    """mean CE of softmax(x @ w + b) vs labels, streamed over vocab tiles.
    Emits per-row-tile partial sums (row axis parallel) and finishes the mean outside."""
    M, H = x.shape
    V = w.shape[1]
    tm = _pick_tile(M, tm, 16)
    tv = _pick_tile(V, tv, 128)
    nm = M // tm
    block_bytes = (_bytes((tm, H), x.dtype) + _bytes((H, tv), w.dtype)
                   + _bytes((1, tv), jnp.float32) + _bytes((tm, 1), jnp.int32)
                   + 2 * _bytes((1, 1), jnp.float32))
    num, den = pl.pallas_call(
        _cross_entropy_kernel,
        out_shape=(jax.ShapeDtypeStruct((nm, 1), jnp.float32),
                   jax.ShapeDtypeStruct((nm, 1), jnp.float32)),
        grid=(nm, V // tv),
        in_specs=[
            pl.BlockSpec((tm, H), lambda i, j: (i, 0)),
            pl.BlockSpec((H, tv), lambda i, j: (0, j)),
            pl.BlockSpec((1, tv), lambda i, j: (0, j)),
            pl.BlockSpec((tm, 1), lambda i, j: (i, 0)),
        ],
        out_specs=(pl.BlockSpec((1, 1), lambda i, j: (i, 0)),
                   pl.BlockSpec((1, 1), lambda i, j: (i, 0))),
        scratch_shapes=[pltpu.VMEM((tm, 1), jnp.float32),
                        pltpu.VMEM((tm, 1), jnp.float32),
                        pltpu.VMEM((tm, 1), jnp.float32)],
        compiler_params=_compiler_params(
            ("parallel", "arbitrary"), block_bytes,
            scratch_bytes=3 * _bytes((tm, 1), jnp.float32)),
    )(x, w, b.reshape(1, V).astype(jnp.float32),
      labels.reshape(M, 1).astype(jnp.int32))
    return jnp.sum(num) / jnp.maximum(jnp.sum(den), 1.0)


# ------------------------- synthetic BERT parameters ------------------------

def init_params(key, vocab_size, hidden, num_layers, num_heads, intermediate,
                max_pos, type_vocab=2):
    def normal(k, shape):
        return 0.02 * jax.random.normal(k, shape, dtype=jnp.float32)

    keys = iter(jax.random.split(key, 8 + num_layers * 8))
    params = {
        "word_emb": normal(next(keys), (vocab_size, hidden)),
        "pos_emb": normal(next(keys), (max_pos, hidden)),
        "type_emb": normal(next(keys), (type_vocab, hidden)),
        "emb_ln_g": jnp.ones((hidden,), jnp.float32),
        "emb_ln_b": jnp.zeros((hidden,), jnp.float32),
        "cls_w": normal(next(keys), (hidden, vocab_size)).astype(jnp.bfloat16),
        "cls_b": jnp.zeros((vocab_size,), jnp.float32),
        "layers": [],
    }
    for _ in range(num_layers):
        q_w = normal(next(keys), (hidden, hidden))
        k_w = normal(next(keys), (hidden, hidden))
        v_w = normal(next(keys), (hidden, hidden))
        params["layers"].append({
            "qkv_w": jnp.stack([q_w, k_w, v_w]).astype(jnp.bfloat16),  # [3, H, H]
            "qkv_b": jnp.zeros((3, hidden), jnp.float32),
            "ao_w": normal(next(keys), (hidden, hidden)).astype(jnp.bfloat16),
            "ao_b": jnp.zeros((hidden,), jnp.float32),
            "ao_ln_g": jnp.ones((hidden,), jnp.float32),
            "ao_ln_b": jnp.zeros((hidden,), jnp.float32),
            "i_w": normal(next(keys), (hidden, intermediate)).astype(jnp.bfloat16),
            "i_b": jnp.zeros((intermediate,), jnp.float32),
            "o_w": normal(next(keys), (intermediate, hidden)).astype(jnp.bfloat16),
            "o_b": jnp.zeros((hidden,), jnp.float32),
            "o_ln_g": jnp.ones((hidden,), jnp.float32),
            "o_ln_b": jnp.zeros((hidden,), jnp.float32),
        })
    return params


# ----------------------------- model forward --------------------------------

def bert_encoder(params, x_ids, attention_mask, num_heads):
    B, S = x_ids.shape
    H = params["word_emb"].shape[1]

    # Embedding lookups kept as JAX glue (gather); everything else is Pallas.
    emb = (jnp.take(params["word_emb"], x_ids, axis=0)
           + params["pos_emb"][:S][None, :, :]
           + params["type_emb"][0][None, None, :])
    h2d = layer_norm(emb.reshape(B * S, H),
                     params["emb_ln_g"], params["emb_ln_b"])          # bf16 [M, H]

    if attention_mask is None:
        mask3d = None                                  # no mask DMA at all
    elif attention_mask.ndim == 2:
        mask3d = jnp.broadcast_to(
            attention_mask[:, None, :].astype(jnp.float32), (B, S, S))
    else:
        mask3d = attention_mask

    for layer in params["layers"]:
        qkv = qkv_linear(h2d, layer["qkv_w"], layer["qkv_b"])          # [3, M, H]
        qkv = qkv.reshape(3, B, S, H)                                  # free reshape
        ctx = multi_head_attention(qkv, mask3d, num_heads)             # [B, S, H]
        h2d = linear_residual_layernorm(
            ctx.reshape(B * S, H), layer["ao_w"], layer["ao_b"],
            h2d, layer["ao_ln_g"], layer["ao_ln_b"])
        inter = linear(h2d, layer["i_w"], layer["i_b"], activation="gelu")
        h2d = linear_residual_layernorm(
            inter, layer["o_w"], layer["o_b"],
            h2d, layer["o_ln_g"], layer["o_ln_b"])
    return h2d                                                         # [M, H] bf16


def language_model_forward(params, x, y=None, mask=None, num_heads=4):
    """Mirrors LanguageModel.forward: mean CE loss if y is given, softmax otherwise."""
    B, S = x.shape
    V = params["cls_w"].shape[1]
    if y is not None:
        h2d = bert_encoder(params, x, mask, num_heads)
        return cross_entropy_from_hidden(h2d, params["cls_w"], params["cls_b"],
                                         y.reshape(-1))
    h2d = bert_encoder(params, x, None, num_heads)   # inference path: no mask (as in torch)
    return classifier_softmax(h2d, params["cls_w"], params["cls_b"]).reshape(B, S, V)


# ---------------------------------- main -------------------------------------

if __name__ == "__main__":
    B, S, H, V = 2, 8, 32, 64
    NUM_LAYERS, NUM_HEADS, INTERMEDIATE, MAX_POS = 2, 4, 128, 512

    key = jax.random.PRNGKey(0)
    pkey, xkey, ykey = jax.random.split(key, 3)
    params = init_params(pkey, V, H, NUM_LAYERS, NUM_HEADS, INTERMEDIATE, MAX_POS)

    x = jax.random.randint(xkey, (B, S), 0, V, dtype=jnp.int32)
    y = jax.random.randint(ykey, (B, S), 0, V, dtype=jnp.int32)

    # SFT-style mask: prompt (first half) fully visible, answer part causal.
    prompt_len = S // 2
    idx = jnp.arange(S)
    causal = (idx[None, :] <= idx[:, None]).astype(jnp.float32)
    mask2d = jnp.where(idx[None, :] < prompt_len, 1.0, causal)
    mask = jnp.broadcast_to(mask2d[None], (B, S, S))

    loss = language_model_forward(params, x, y=y, mask=mask, num_heads=NUM_HEADS)
    probs = language_model_forward(params, x, num_heads=NUM_HEADS)
    jax.block_until_ready((loss, probs))

    assert loss.shape == () and jnp.isfinite(loss)
    assert probs.shape == (B, S, V)
    assert jnp.allclose(jnp.sum(probs.astype(jnp.float32), axis=-1), 1.0, atol=1e-2)
    print("KERNEL_OK")
</pallas_src>

<mosaic_0001>
module attributes {stable_mosaic.version = 11 : i64} {
  func.func @kernel(%arg0: i32, %arg1: memref<16x32xf32, #tpu.memory_space<vmem>>, %arg2: memref<1x32xf32, #tpu.memory_space<vmem>>, %arg3: memref<1x32xf32, #tpu.memory_space<vmem>>, %arg4: memref<16x32xbf16, #tpu.memory_space<vmem>>) attributes {dimension_semantics = [#tpu.dimension_semantics<parallel>], iteration_bounds = array<i64: 1>, scalar_prefetch = 0 : i64, scratch_operands = 0 : i64, tpu.core_type = #tpu.core_type<tc>, window_params = [{transform_indices = @transform_0, window_bounds = array<i64: 16, 32>}, {pipeline_mode = #tpu.pipeline_mode<synchronous>, transform_indices = @transform_1, window_bounds = array<i64: 1, 32>}, {pipeline_mode = #tpu.pipeline_mode<synchronous>, transform_indices = @transform_2, window_bounds = array<i64: 1, 32>}, {transform_indices = @transform_3, window_bounds = array<i64: 16, 32>}]} {
    %c0 = arith.constant 0 : index
    %c0_0 = arith.constant 0 : index
    %0 = vector.load %arg1[%c0, %c0_0] : memref<16x32xf32, #tpu.memory_space<vmem>>, vector<16x32xf32>
    %cst = arith.constant dense<0.000000e+00> : vector<16xf32>
    %1 = vector.multi_reduction <add>, %0, %cst [1] : vector<16x32xf32> to vector<16xf32>
    %2 = vector.shape_cast %1 : vector<16xf32> to vector<16x1xf32>
    %cst_1 = arith.constant 3.200000e+01 : f32
    %3 = vector.broadcast %cst_1 : f32 to vector<16x1xf32>
    %4 = arith.divf %2, %3 : vector<16x1xf32>
    %5 = vector.broadcast %4 : vector<16x1xf32> to vector<16x32xf32>
    %6 = arith.subf %0, %5 : vector<16x32xf32>
    %7 = arith.mulf %6, %6 : vector<16x32xf32>
    %cst_2 = arith.constant dense<0.000000e+00> : vector<16xf32>
    %8 = vector.multi_reduction <add>, %7, %cst_2 [1] : vector<16x32xf32> to vector<16xf32>
    %9 = vector.shape_cast %8 : vector<16xf32> to vector<16x1xf32>
    %cst_3 = arith.constant 3.200000e+01 : f32
    %10 = vector.broadcast %cst_3 : f32 to vector<16x1xf32>
    %11 = arith.divf %9, %10 : vector<16x1xf32>
    %cst_4 = arith.constant 9.99999996E-13 : f32
    %12 = vector.broadcast %cst_4 : f32 to vector<16x1xf32>
    %13 = arith.addf %11, %12 : vector<16x1xf32>
    %14 = math.rsqrt %13 : vector<16x1xf32>
    %15 = vector.broadcast %14 : vector<16x1xf32> to vector<16x32xf32>
    %16 = arith.mulf %6, %15 : vector<16x32xf32>
    %c0_5 = arith.constant 0 : index
    %c0_6 = arith.constant 0 : index
    %17 = vector.load %arg2[%c0_5, %c0_6] : memref<1x32xf32, #tpu.memory_space<vmem>>, vector<1x32xf32>
    %18 = vector.broadcast %17 : vector<1x32xf32> to vector<16x32xf32>
    %19 = arith.mulf %16, %18 : vector<16x32xf32>
    %c0_7 = arith.constant 0 : index
    %c0_8 = arith.constant 0 : index
    %20 = vector.load %arg3[%c0_7, %c0_8] : memref<1x32xf32, #tpu.memory_space<vmem>>, vector<1x32xf32>
    %21 = vector.broadcast %20 : vector<1x32xf32> to vector<16x32xf32>
    %22 = arith.addf %19, %21 : vector<16x32xf32>
    %23 = arith.truncf %22 : vector<16x32xf32> to vector<16x32xbf16>
    %c0_9 = arith.constant 0 : index
    %c0_10 = arith.constant 0 : index
    %24 = vector.load %arg4[%c0_9, %c0_10] : memref<16x32xbf16, #tpu.memory_space<vmem>>, vector<16x32xbf16>
    tpu.vector_store %arg4[%c0_9, %c0_10], %23 {strides = array<i32>} : memref<16x32xbf16, #tpu.memory_space<vmem>>, vector<16x32xbf16>,
    return
  }
  func.func @transform_0(%arg0: i32) -> (i32, i32) {
    %c0_i32 = arith.constant 0 : i32
    %c0_i32_0 = arith.constant 0 : i32
    return %arg0, %c0_i32 : i32, i32
  }
  func.func @transform_1(%arg0: i32) -> (i32, i32) {
    %c0_i32 = arith.constant 0 : i32
    %c0_i32_0 = arith.constant 0 : i32
    %c0_i32_1 = arith.constant 0 : i32
    return %c0_i32, %c0_i32_0 : i32, i32
  }
  func.func @transform_2(%arg0: i32) -> (i32, i32) {
    %c0_i32 = arith.constant 0 : i32
    %c0_i32_0 = arith.constant 0 : i32
    %c0_i32_1 = arith.constant 0 : i32
    return %c0_i32, %c0_i32_0 : i32, i32
  }
  func.func @transform_3(%arg0: i32) -> (i32, i32) {
    %c0_i32 = arith.constant 0 : i32
    %c0_i32_0 = arith.constant 0 : i32
    return %arg0, %c0_i32 : i32, i32
  }
}

</mosaic_0001>

<llo_original>
// kernel: tpu_custom_call.1
$region0: #{tpu_custom_call.1}
  #allocation0 [shape = 'u32[]', space=smem, size = 0x4, offset = 0x4, fixed_abs, tag = 'smem constant byte address 0x4 - core index']
  #allocation1 [shape = 'u32[144,128]{1,0:T(1,128)}', space=vmem, size = 0x12000, scoped, tag = 'internal scratch']
  %s0 = inlined_call_operand.hbm [shape: f32[16,32], index: 0, kind: input, shape index: {}]
  %s1 = inlined_call_operand.vmem [shape: f32[1,32], index: 1, kind: input, shape index: {}]
  %s2 = inlined_call_operand.vmem [shape: f32[1,32], index: 2, kind: input, shape index: {}]
  %s3 = inlined_call_operand.hbm [shape: bf16[16,32], index: 3, kind: output, shape index: {}]
  %s4 = sld [smem:[#allocation0]]
  $region26: #{tpu_custom_call.1} parent=0
    _
  %s6 = ssub.s32 1, %s4
  %s7 = scalar_select 0, %s6, %s4
  $region1: #{tpu_custom_call.1} parent=0
    #allocation2 [shape = 'u8[8192]{0}', space=vmem, size = 0x2000, scoped, tag = 'input window, operand 0, single buffered']
    #allocation3 [shape = 's32[1]{0}', space=sflag, size = 0x4, scoped, tag = 'scoped memory for tpu_custom_call.1']
    #allocation4 [shape = 's32[1]{0}', space=sflag, size = 0x4, scoped, tag = 'scoped memory for tpu_custom_call.1']
    #allocation5 [shape = 'u8[4096]{0}', space=vmem, size = 0x1000, scoped, tag = 'output window, operand 0, single buffered']
    %8 = vsyncpa [#allocation3], 0
    %9 = vsyncpa [#allocation4], 0
    // Predicated region
    $region2: #{tpu_custom_call.1} parent=1 // pred_check
      _
    $region3: #{tpu_custom_call.1} parent=1 // pred_check_branch
      %11 = sbr.rel (0) target = $region5
    $region4: #{tpu_custom_call.1} parent=1 // pred_region
      %s13 = ssub.s32 256, 256
      %14 = vsyncadd [#allocation3], %s13
      %s15 = sshll.u32 [#allocation2], 4
      %s16 = int_to_ptr.vmem [resolvable:$true] %s15
      %21 = dma.hbm_to_vmem [thread:$0]  %s0, 256, %s16, [#allocation3], 128, 128, 8
    $region5: #{tpu_custom_call.1} parent=1 // pred_fallthru
      _
    // Predicated region
    $region6: #{tpu_custom_call.1} parent=1 // pred_check
      _
    $region7: #{tpu_custom_call.1} parent=1 // pred_check_branch
      %23 = sbr.rel (0) target = $region9
    $region8: #{tpu_custom_call.1} parent=1 // pred_region
      _
    $region9: #{tpu_custom_call.1} parent=1 // pred_fallthru
      _
    // Predicated region
    $region10: #{tpu_custom_call.1} parent=1 // pred_check
      _
    $region11: #{tpu_custom_call.1} parent=1 // pred_check_branch
      %25 = sbr.rel (0) target = $region13
    $region12: #{tpu_custom_call.1} parent=1 // pred_region
      _
    $region13: #{tpu_custom_call.1} parent=1 // pred_fallthru
      _
    // Predicated region
    $region14: #{tpu_custom_call.1} parent=1 // pred_check
      _
    $region15: #{tpu_custom_call.1} parent=1 // pred_check_branch
      %27 = sbr.rel (0) target = $region17
    $region16: #{tpu_custom_call.1} parent=1 // pred_region
      %28 = dma.done [#allocation3], 256
    $region17: #{tpu_custom_call.1} parent=1 // pred_fallthru
      _
    %v29 = vld [vmem:[#allocation2] sm:$0xff]
    %v30 = vld [vmem:[#allocation2 + $0x8] sm:$0xff]
    %vm31 = vcmask 261120
    %v32 = vsel %vm31, %v29, 0.0
    %33 = vadd.xlane.f32.xlu0 %v32
    %v34 = vpop.xlane.xlu0 %33
    %v35 = vsel %vm31, %v30, 0.0
    %36 = vadd.xlane.f32.xlu0 %v35
    %v37 = vpop.xlane.xlu0 %36
    %v38 = vrcp.pop 32.0
    %v39 = vmul.f32 %v34, %v38
    %v40 = vmul.f32 %v37, %v38
    %v41 = vsub.f32 %v29, %v39
    %v42 = vsub.f32 %v30, %v40
    %v43 = vmul.f32 %v41, %v41
    %v44 = vmul.f32 %v42, %v42
    %v45 = vsel %vm31, %v43, 0.0
    %46 = vadd.xlane.f32.xlu0 %v45
    %v47 = vpop.xlane.xlu0 %46
    %v48 = vsel %vm31, %v44, 0.0
    %49 = vadd.xlane.f32.xlu0 %v48
    %v50 = vpop.xlane.xlu0 %49
    %v51 = vmul.f32 %v47, %v38
    %v52 = vmul.f32 %v50, %v38
    %v53 = vadd.f32 %v51, 1e-12
    %v54 = vadd.f32 %v52, 1e-12
    %v55 = vrsqrt.pop %v53
    %v56 = vrsqrt.pop %v54
    %v57 = vmul.f32 %v41, %v55
    %v58 = vmul.f32 %v42, %v56
    %v59 = vld [vmem:[%s1] sm:$0x1]
    %v61 = vlaneseq
    %v62 = vshrl.u32 %v61, 7
    %v63 = vsub.s32 0, %v62
    %v64 = vrot.slane %v59, %v63
    %v66 = vmul.f32 %v57, %v64
    %v67 = vmul.f32 %v58, %v64
    %v68 = vld [vmem:[%s2] sm:$0x1]
    %v70 = vlaneseq
    %v71 = vshrl.u32 %v70, 7
    %v72 = vsub.s32 0, %v71
    %v73 = vrot.slane %v68, %v72
    %v75 = vadd.f32 %v66, %v73
    %v76 = vadd.f32 %v67, %v73
    %v77 = vpack.c.bf16 %v76, %v75
    %v79 = vunpack.c.l.b16 %v77
    %v80 = vunpack.c.h.b16 %v77
    %v81 = vpack.c.b16 %v79, %v79
    %v82 = vpack.c.b16 %v80, %v80
    %vm85 = vcmask 257024
    %86 = vst.msk [vmem:[#allocation5] sm:$0xf] %vm85, %v81
    %87 = vst.msk [vmem:[#allocation5 + $0x4] sm:$0xf] %vm85, %v82
    // Predicated region
    $region18: #{tpu_custom_call.1} parent=1 // pred_check
      _
    $region19: #{tpu_custom_call.1} parent=1 // pred_check_branch
      %89 = sbr.rel (0) target = $region21
    $region20: #{tpu_custom_call.1} parent=1 // pred_region
      %s91 = ssub.s32 128, 128
      %92 = vsyncadd [#allocation4], %s91
      %s93 = sshll.u32 [#allocation5], 4
      %s94 = int_to_ptr.vmem [resolvable:$true] %s93
      %99 = dma.vmem_to_hbm [thread:$0]  %s94, 128, %s3, [#allocation4], 64, 64, 4
    $region21: #{tpu_custom_call.1} parent=1 // pred_fallthru
      _
    // Predicated region
    $region22: #{tpu_custom_call.1} parent=1 // pred_check
      _
    $region23: #{tpu_custom_call.1} parent=1 // pred_check_branch
      %101 = sbr.rel (0) target = $region25
    $region24: #{tpu_custom_call.1} parent=1 // pred_region
      %102 = dma.done [#allocation4], 128
    $region25: #{tpu_custom_call.1} parent=1 // pred_fallthru
      _
    %103 = vsyncpa [#allocation3], 1
    %104 = vsyncpa [#allocation4], 1

</llo_original>
